<compile_context>
chip_gen: v7x
topology: tpu7x:2x2x1
jax: 0.10.0
libtpu: 0.0.40
codegen_flags: <defaults>
</compile_context>

<pallas_src>
import jax
import jax.numpy as jnp
import numpy as np
from jax.experimental import pallas as pl
from jax.experimental.pallas import tpu as pltpu

F_DIMS = [11, 64, 32, 16, 8]   # conv1..conv4 widths (conv5: GCNConv(8,1) is
                               # defined in __init__ but never used in forward)
SUBLANE = 8


def _round_up(x, m):
    return (x + m - 1) // m * m


def _gcn_layer(a, h, w_ref, b_ref, relu):
    # h @ W on the MXU (bf16 in, f32 accumulate), then neighborhood aggregation
    # A_norm @ (hW) on the MXU, then bias (+ optional ReLU) on the VPU in f32.
    xw = jnp.dot(h, w_ref[...], preferred_element_type=jnp.float32)
    agg = jnp.dot(a, xw.astype(jnp.bfloat16), preferred_element_type=jnp.float32)
    out = agg + b_ref[...]
    if relu:
        out = jnp.maximum(out, 0.0)
    return out


def gnn_kernel(a_ref, x_ref,
               w1_ref, b1_ref, w2_ref, b2_ref,
               w3_ref, b3_ref, w4_ref, b4_ref,
               o_ref):
    a = a_ref[0]            # (NP, NP)   bf16 normalized adjacency of this graph
    h = x_ref[0]            # (NP, F_IN) bf16 node features
    # Dropout is identity at inference (training=False), so it is omitted.
    # NOTE: padded node rows/cols of A and padded feature cols of x are exactly
    # zero; any relu(bias) garbage that the broadcast writes into padded node
    # rows never leaks into real rows because A's padded columns are zero.
    h = _gcn_layer(a, h, w1_ref, b1_ref, relu=True).astype(jnp.bfloat16)
    h = _gcn_layer(a, h, w2_ref, b2_ref, relu=True).astype(jnp.bfloat16)
    h = _gcn_layer(a, h, w3_ref, b3_ref, relu=True).astype(jnp.bfloat16)
    o_ref[0] = _gcn_layer(a, h, w4_ref, b4_ref, relu=False)   # f32 out


def gnn_forward_pallas(a_norm, x, params):
    """a_norm: (B, NP, NP) bf16, x: (B, NP, F_IN_P) bf16,
    params: 4 tuples of (W bf16 (K, F_out), b f32 (1, F_out)).  Shared weights,
    one graph per grid step ('parallel' -> both TCs on v7x)."""
    B, NP, _ = a_norm.shape
    _, _, FINP = x.shape
    FOUT = params[-1][0].shape[1]

    in_specs = [
        pl.BlockSpec((1, NP, NP), lambda b: (b, 0, 0)),
        pl.BlockSpec((1, NP, FINP), lambda b: (b, 0, 0)),
    ]
    flat = []
    for w, bias in params:
        in_specs.append(pl.BlockSpec(w.shape, lambda b: (0, 0)))
        in_specs.append(pl.BlockSpec(bias.shape, lambda b: (0, 0)))
        flat.extend([w, bias])

    return pl.pallas_call(
        gnn_kernel,
        out_shape=jax.ShapeDtypeStruct((B, NP, FOUT), jnp.float32),
        grid=(B,),
        in_specs=in_specs,
        out_specs=pl.BlockSpec((1, NP, FOUT), lambda b: (b, 0, 0)),
        compiler_params=pltpu.CompilerParams(
            dimension_semantics=("parallel",)),
    )(a_norm, x, *flat)


def build_normalized_adjacency(edge_index, num_nodes):
    """Dense GCN-normalized adjacency from a (2, E) edge_index, matching
    PyG gcn_norm semantics: duplicate edges are counted in the degree, and
    self-loops are only added for nodes that do not already have one."""
    src, dst = edge_index[0], edge_index[1]
    adj = jnp.zeros((num_nodes, num_nodes), jnp.float32).at[dst, src].add(1.0)
    diag = jnp.diagonal(adj)
    adj = adj + jnp.diag(jnp.where(diag == 0.0, 1.0, 0.0))  # remaining self-loops
    deg = adj.sum(axis=1)
    dinv = jnp.where(deg > 0, 1.0 / jnp.sqrt(deg), 0.0)
    return dinv[:, None] * adj * dinv[None, :]


def glorot(key, fan_in, fan_out):
    lim = float(np.sqrt(6.0 / (fan_in + fan_out)))
    return jax.random.uniform(key, (fan_in, fan_out), jnp.float32, -lim, lim)


def pad_to(x, shape):
    out = jnp.zeros(shape, x.dtype)
    return out.at[tuple(slice(0, s) for s in x.shape)].set(x)


def reference_forward(a_norm, x, params):
    h = x
    for i, (w, b) in enumerate(params):
        h = a_norm @ (h @ w) + b[None, :]
        if i < len(params) - 1:
            h = jnp.maximum(h, 0.0)
    return h


if __name__ == "__main__":
    key = jax.random.PRNGKey(0)
    B, N, E = 8, 16, 32                       # 8 small graphs, 16 nodes, 32 edges
    NP = _round_up(N, SUBLANE)                # 16 (sublane-aligned, no 128 pad)
    F_IN_P = _round_up(F_DIMS[0], SUBLANE)    # 11 -> 16

    k_x, k_e, k_w, k_b = jax.random.split(key, 4)

    x = jax.random.normal(k_x, (B, N, F_DIMS[0]), jnp.float32)
    edges = jax.random.randint(k_e, (B, 2, E), 0, N)
    a_norm = jnp.stack([build_normalized_adjacency(edges[b], N) for b in range(B)])

    # Deterministic parameters for the 4 layers used in forward().
    params = []
    wkeys = jax.random.split(k_w, 4)
    bkeys = jax.random.split(k_b, 4)
    for i in range(4):
        fin, fout = F_DIMS[i], F_DIMS[i + 1]
        w = glorot(wkeys[i], fin, fout)
        b = 0.1 * jax.random.normal(bkeys[i], (fout,), jnp.float32)
        params.append((w, b))

    # Pack for the kernel: bf16 compute dtypes, minimal (8-aligned) padding.
    a_k = pad_to(a_norm, (B, NP, NP)).astype(jnp.bfloat16)
    x_k = pad_to(x, (B, NP, F_IN_P)).astype(jnp.bfloat16)
    params_k = []
    for i, (w, b) in enumerate(params):
        kin = F_IN_P if i == 0 else F_DIMS[i]
        params_k.append((pad_to(w, (kin, F_DIMS[i + 1])).astype(jnp.bfloat16),
                         b[None, :].astype(jnp.float32)))

    out = jax.block_until_ready(gnn_forward_pallas(a_k, x_k, params_k))
    out = np.asarray(out)[:, :N, :]           # (B, 16, 8)

    # Reference: same (bf16-quantized) inputs, full f32 math.
    a_f = a_k.astype(jnp.float32)
    x_f = x_k.astype(jnp.float32)
    params_f = [(w.astype(jnp.float32), bias[0]) for w, bias in params_k]
    ref = np.stack([np.asarray(reference_forward(a_f[b], x_f[b], params_f))
                    for b in range(B)])[:, :N, :]

    np.testing.assert_allclose(out, ref, atol=2e-2, rtol=2e-2)
    print("KERNEL_OK")
</pallas_src>

<mosaic_0001>
module attributes {stable_mosaic.version = 11 : i64} {
  func.func @gnn_kernel(%arg0: i32, %arg1: memref<1x16x16xbf16, #tpu.memory_space<vmem>>, %arg2: memref<1x16x16xbf16, #tpu.memory_space<vmem>>, %arg3: memref<16x64xbf16, #tpu.memory_space<vmem>>, %arg4: memref<1x64xf32, #tpu.memory_space<vmem>>, %arg5: memref<64x32xbf16, #tpu.memory_space<vmem>>, %arg6: memref<1x32xf32, #tpu.memory_space<vmem>>, %arg7: memref<32x16xbf16, #tpu.memory_space<vmem>>, %arg8: memref<1x16xf32, #tpu.memory_space<vmem>>, %arg9: memref<16x8xbf16, #tpu.memory_space<vmem>>, %arg10: memref<1x8xf32, #tpu.memory_space<vmem>>, %arg11: memref<1x16x8xf32, #tpu.memory_space<vmem>>) attributes {dimension_semantics = [#tpu.dimension_semantics<parallel>], iteration_bounds = array<i64: 8>, scalar_prefetch = 0 : i64, scratch_operands = 0 : i64, tpu.core_type = #tpu.core_type<tc>, window_params = [{transform_indices = @transform_0, window_bounds = array<i64: 1, 16, 16>}, {transform_indices = @transform_1, window_bounds = array<i64: 1, 16, 16>}, {pipeline_mode = #tpu.pipeline_mode<synchronous>, transform_indices = @transform_2, window_bounds = array<i64: 16, 64>}, {pipeline_mode = #tpu.pipeline_mode<synchronous>, transform_indices = @transform_3, window_bounds = array<i64: 1, 64>}, {pipeline_mode = #tpu.pipeline_mode<synchronous>, transform_indices = @transform_4, window_bounds = array<i64: 64, 32>}, {pipeline_mode = #tpu.pipeline_mode<synchronous>, transform_indices = @transform_5, window_bounds = array<i64: 1, 32>}, {pipeline_mode = #tpu.pipeline_mode<synchronous>, transform_indices = @transform_6, window_bounds = array<i64: 32, 16>}, {pipeline_mode = #tpu.pipeline_mode<synchronous>, transform_indices = @transform_7, window_bounds = array<i64: 1, 16>}, {pipeline_mode = #tpu.pipeline_mode<synchronous>, transform_indices = @transform_8, window_bounds = array<i64: 16, 8>}, {pipeline_mode = #tpu.pipeline_mode<synchronous>, transform_indices = @transform_9, window_bounds = array<i64: 1, 8>}, {transform_indices = @transform_10, window_bounds = array<i64: 1, 16, 8>}]} {
    %c0 = arith.constant 0 : index
    %c0_0 = arith.constant 0 : index
    %c0_1 = arith.constant 0 : index
    %0 = vector.load %arg1[%c0, %c0_0, %c0_1] : memref<1x16x16xbf16, #tpu.memory_space<vmem>>, vector<1x16x16xbf16>
    %1 = vector.shape_cast %0 : vector<1x16x16xbf16> to vector<16x16xbf16>
    %c0_2 = arith.constant 0 : index
    %c0_3 = arith.constant 0 : index
    %c0_4 = arith.constant 0 : index
    %2 = vector.load %arg2[%c0_2, %c0_3, %c0_4] : memref<1x16x16xbf16, #tpu.memory_space<vmem>>, vector<1x16x16xbf16>
    %3 = vector.shape_cast %2 : vector<1x16x16xbf16> to vector<16x16xbf16>
    %c0_5 = arith.constant 0 : index
    %c0_6 = arith.constant 0 : index
    %4 = vector.load %arg3[%c0_5, %c0_6] : memref<16x64xbf16, #tpu.memory_space<vmem>>, vector<16x64xbf16>
    %cst = arith.constant dense<0.000000e+00> : vector<16x64xf32>
    %5 = tpu.matmul %3, %4, %cst {dimension_numbers = #tpu.dot_dimension_numbers<[1], [0], [0], [1], [0, 0, 1, 1], [], []>} : vector<16x16xbf16>, vector<16x64xbf16>, vector<16x64xf32> -> vector<16x64xf32>
    %6 = arith.truncf %5 : vector<16x64xf32> to vector<16x64xbf16>
    %cst_7 = arith.constant dense<0.000000e+00> : vector<16x64xf32>
    %7 = tpu.matmul %1, %6, %cst_7 {dimension_numbers = #tpu.dot_dimension_numbers<[1], [0], [0], [1], [0, 0, 1, 1], [], []>} : vector<16x16xbf16>, vector<16x64xbf16>, vector<16x64xf32> -> vector<16x64xf32>
    %c0_8 = arith.constant 0 : index
    %c0_9 = arith.constant 0 : index
    %8 = vector.load %arg4[%c0_8, %c0_9] : memref<1x64xf32, #tpu.memory_space<vmem>>, vector<1x64xf32>
    %9 = vector.broadcast %8 : vector<1x64xf32> to vector<16x64xf32>
    %10 = arith.addf %7, %9 : vector<16x64xf32>
    %cst_10 = arith.constant 0.000000e+00 : f32
    %11 = vector.broadcast %cst_10 : f32 to vector<16x64xf32>
    %12 = arith.maximumf %10, %11 : vector<16x64xf32>
    %13 = arith.truncf %12 : vector<16x64xf32> to vector<16x64xbf16>
    %c0_11 = arith.constant 0 : index
    %c0_12 = arith.constant 0 : index
    %14 = vector.load %arg5[%c0_11, %c0_12] : memref<64x32xbf16, #tpu.memory_space<vmem>>, vector<64x32xbf16>
    %cst_13 = arith.constant dense<0.000000e+00> : vector<16x32xf32>
    %15 = tpu.matmul %13, %14, %cst_13 {dimension_numbers = #tpu.dot_dimension_numbers<[1], [0], [0], [1], [0, 0, 1, 1], [], []>} : vector<16x64xbf16>, vector<64x32xbf16>, vector<16x32xf32> -> vector<16x32xf32>
    %16 = arith.truncf %15 : vector<16x32xf32> to vector<16x32xbf16>
    %cst_14 = arith.constant dense<0.000000e+00> : vector<16x32xf32>
    %17 = tpu.matmul %1, %16, %cst_14 {dimension_numbers = #tpu.dot_dimension_numbers<[1], [0], [0], [1], [0, 0, 1, 1], [], []>} : vector<16x16xbf16>, vector<16x32xbf16>, vector<16x32xf32> -> vector<16x32xf32>
    %c0_15 = arith.constant 0 : index
    %c0_16 = arith.constant 0 : index
    %18 = vector.load %arg6[%c0_15, %c0_16] : memref<1x32xf32, #tpu.memory_space<vmem>>, vector<1x32xf32>
    %19 = vector.broadcast %18 : vector<1x32xf32> to vector<16x32xf32>
    %20 = arith.addf %17, %19 : vector<16x32xf32>
    %cst_17 = arith.constant 0.000000e+00 : f32
    %21 = vector.broadcast %cst_17 : f32 to vector<16x32xf32>
    %22 = arith.maximumf %20, %21 : vector<16x32xf32>
    %23 = arith.truncf %22 : vector<16x32xf32> to vector<16x32xbf16>
    %c0_18 = arith.constant 0 : index
    %c0_19 = arith.constant 0 : index
    %24 = vector.load %arg7[%c0_18, %c0_19] : memref<32x16xbf16, #tpu.memory_space<vmem>>, vector<32x16xbf16>
    %cst_20 = arith.constant dense<0.000000e+00> : vector<16x16xf32>
    %25 = tpu.matmul %23, %24, %cst_20 {dimension_numbers = #tpu.dot_dimension_numbers<[1], [0], [0], [1], [0, 0, 1, 1], [], []>} : vector<16x32xbf16>, vector<32x16xbf16>, vector<16x16xf32> -> vector<16x16xf32>
    %26 = arith.truncf %25 : vector<16x16xf32> to vector<16x16xbf16>
    %cst_21 = arith.constant dense<0.000000e+00> : vector<16x16xf32>
    %27 = tpu.matmul %1, %26, %cst_21 {dimension_numbers = #tpu.dot_dimension_numbers<[1], [0], [0], [1], [0, 0, 1, 1], [], []>} : vector<16x16xbf16>, vector<16x16xbf16>, vector<16x16xf32> -> vector<16x16xf32>
    %c0_22 = arith.constant 0 : index
    %c0_23 = arith.constant 0 : index
    %28 = vector.load %arg8[%c0_22, %c0_23] : memref<1x16xf32, #tpu.memory_space<vmem>>, vector<1x16xf32>
    %29 = vector.broadcast %28 : vector<1x16xf32> to vector<16x16xf32>
    %30 = arith.addf %27, %29 : vector<16x16xf32>
    %cst_24 = arith.constant 0.000000e+00 : f32
    %31 = vector.broadcast %cst_24 : f32 to vector<16x16xf32>
    %32 = arith.maximumf %30, %31 : vector<16x16xf32>
    %33 = arith.truncf %32 : vector<16x16xf32> to vector<16x16xbf16>
    %c0_25 = arith.constant 0 : index
    %c0_26 = arith.constant 0 : index
    %34 = vector.load %arg9[%c0_25, %c0_26] : memref<16x8xbf16, #tpu.memory_space<vmem>>, vector<16x8xbf16>
    %cst_27 = arith.constant dense<0.000000e+00> : vector<16x8xf32>
    %35 = tpu.matmul %33, %34, %cst_27 {dimension_numbers = #tpu.dot_dimension_numbers<[1], [0], [0], [1], [0, 0, 1, 1], [], []>} : vector<16x16xbf16>, vector<16x8xbf16>, vector<16x8xf32> -> vector<16x8xf32>
    %36 = arith.truncf %35 : vector<16x8xf32> to vector<16x8xbf16>
    %cst_28 = arith.constant dense<0.000000e+00> : vector<16x8xf32>
    %37 = tpu.matmul %1, %36, %cst_28 {dimension_numbers = #tpu.dot_dimension_numbers<[1], [0], [0], [1], [0, 0, 1, 1], [], []>} : vector<16x16xbf16>, vector<16x8xbf16>, vector<16x8xf32> -> vector<16x8xf32>
    %c0_29 = arith.constant 0 : index
    %c0_30 = arith.constant 0 : index
    %38 = vector.load %arg10[%c0_29, %c0_30] : memref<1x8xf32, #tpu.memory_space<vmem>>, vector<1x8xf32>
    %39 = vector.broadcast %38 : vector<1x8xf32> to vector<16x8xf32>
    %40 = arith.addf %37, %39 : vector<16x8xf32>
    %c0_31 = arith.constant 0 : index
    %c0_32 = arith.constant 0 : index
    %c0_33 = arith.constant 0 : index
    %41 = vector.load %arg11[%c0_31, %c0_32, %c0_33] : memref<1x16x8xf32, #tpu.memory_space<vmem>>, vector<1x16x8xf32>
    %42 = vector.shape_cast %41 : vector<1x16x8xf32> to vector<16x8xf32>
    %43 = vector.shape_cast %40 : vector<16x8xf32> to vector<1x16x8xf32>
    tpu.vector_store %arg11[%c0_31, %c0_32, %c0_33], %43 {strides = array<i32>} : memref<1x16x8xf32, #tpu.memory_space<vmem>>, vector<1x16x8xf32>,
    return
  }
  func.func @transform_0(%arg0: i32) -> (i32, i32, i32) {
    %c0_i32 = arith.constant 0 : i32
    %c0_i32_0 = arith.constant 0 : i32
    %c0_i32_1 = arith.constant 0 : i32
    return %arg0, %c0_i32, %c0_i32_0 : i32, i32, i32
  }
  func.func @transform_1(%arg0: i32) -> (i32, i32, i32) {
    %c0_i32 = arith.constant 0 : i32
    %c0_i32_0 = arith.constant 0 : i32
    %c0_i32_1 = arith.constant 0 : i32
    return %arg0, %c0_i32, %c0_i32_0 : i32, i32, i32
  }
  func.func @transform_2(%arg0: i32) -> (i32, i32) {
    %c0_i32 = arith.constant 0 : i32
    %c0_i32_0 = arith.constant 0 : i32
    %c0_i32_1 = arith.constant 0 : i32
    return %c0_i32, %c0_i32_0 : i32, i32
  }
  func.func @transform_3(%arg0: i32) -> (i32, i32) {
    %c0_i32 = arith.constant 0 : i32
    %c0_i32_0 = arith.constant 0 : i32
    %c0_i32_1 = arith.constant 0 : i32
    return %c0_i32, %c0_i32_0 : i32, i32
  }
  func.func @transform_4(%arg0: i32) -> (i32, i32) {
    %c0_i32 = arith.constant 0 : i32
    %c0_i32_0 = arith.constant 0 : i32
    %c0_i32_1 = arith.constant 0 : i32
    return %c0_i32, %c0_i32_0 : i32, i32
  }
  func.func @transform_5(%arg0: i32) -> (i32, i32) {
    %c0_i32 = arith.constant 0 : i32
    %c0_i32_0 = arith.constant 0 : i32
    %c0_i32_1 = arith.constant 0 : i32
    return %c0_i32, %c0_i32_0 : i32, i32
  }
  func.func @transform_6(%arg0: i32) -> (i32, i32) {
    %c0_i32 = arith.constant 0 : i32
    %c0_i32_0 = arith.constant 0 : i32
    %c0_i32_1 = arith.constant 0 : i32
    return %c0_i32, %c0_i32_0 : i32, i32
  }
  func.func @transform_7(%arg0: i32) -> (i32, i32) {
    %c0_i32 = arith.constant 0 : i32
    %c0_i32_0 = arith.constant 0 : i32
    %c0_i32_1 = arith.constant 0 : i32
    return %c0_i32, %c0_i32_0 : i32, i32
  }
  func.func @transform_8(%arg0: i32) -> (i32, i32) {
    %c0_i32 = arith.constant 0 : i32
    %c0_i32_0 = arith.constant 0 : i32
    %c0_i32_1 = arith.constant 0 : i32
    return %c0_i32, %c0_i32_0 : i32, i32
  }
  func.func @transform_9(%arg0: i32) -> (i32, i32) {
    %c0_i32 = arith.constant 0 : i32
    %c0_i32_0 = arith.constant 0 : i32
    %c0_i32_1 = arith.constant 0 : i32
    return %c0_i32, %c0_i32_0 : i32, i32
  }
  func.func @transform_10(%arg0: i32) -> (i32, i32, i32) {
    %c0_i32 = arith.constant 0 : i32
    %c0_i32_0 = arith.constant 0 : i32
    %c0_i32_1 = arith.constant 0 : i32
    return %arg0, %c0_i32, %c0_i32_0 : i32, i32, i32
  }
}

</mosaic_0001>

<llo_original>
// kernel: tpu_custom_call.1
$region0: #{tpu_custom_call.1}
  #allocation0 [shape = 'u32[]', space=smem, size = 0x4, offset = 0x4, fixed_abs, tag = 'smem constant byte address 0x4 - core index']
  #allocation1 [shape = 'u32[144,128]{1,0:T(1,128)}', space=vmem, size = 0x12000, scoped, tag = 'internal scratch']
  %s0 = inlined_call_operand.vmem [shape: bf16[8,16,16], index: 0, kind: input, shape index: {}]
  %s1 = inlined_call_operand.hbm [shape: bf16[8,16,16], index: 1, kind: input, shape index: {}]
  %s2 = inlined_call_operand.hbm [shape: bf16[16,64], index: 2, kind: input, shape index: {}]
  %s3 = inlined_call_operand.vmem [shape: f32[1,64], index: 3, kind: input, shape index: {}]
  %s4 = inlined_call_operand.vmem [shape: bf16[64,32], index: 4, kind: input, shape index: {}]
  %s5 = inlined_call_operand.vmem [shape: f32[1,32], index: 5, kind: input, shape index: {}]
  %s6 = inlined_call_operand.vmem [shape: bf16[32,16], index: 6, kind: input, shape index: {}]
  %s7 = inlined_call_operand.vmem [shape: f32[1,16], index: 7, kind: input, shape index: {}]
  %s8 = inlined_call_operand.vmem [shape: bf16[16,8], index: 8, kind: input, shape index: {}]
  %s9 = inlined_call_operand.vmem [shape: f32[1,8], index: 9, kind: input, shape index: {}]
  %s10 = inlined_call_operand.vmem [shape: f32[8,16,8], index: 10, kind: output, shape index: {}]
  %s11 = sld [smem:[#allocation0]]
  $region81: #{tpu_custom_call.1} parent=0
    _
  %s13 = ssub.s32 1, %s11
  %s14 = scalar_select 0, %s13, %s11
  $region1: #{tpu_custom_call.1} parent=0
    #allocation2 [shape = 'u8[8192]{0}', space=vmem, size = 0x2000, scoped, tag = 'input window, operand 1']
    #allocation3 [shape = 's32[2]{0}', space=sflag, size = 0x8, scoped, tag = 'scoped memory for tpu_custom_call.1']
    #allocation4 [shape = 'u8[4096]{0}', space=vmem, size = 0x1000, scoped, tag = 'input window, operand 2, single buffered']
    #allocation5 [shape = 's32[1]{0}', space=sflag, size = 0x4, scoped, tag = 'scoped memory for tpu_custom_call.1']
    %15 = vsyncpa [#allocation3], 0
    %s16 = scalar_lea.sflag [#allocation3], 1
    %17 = vsyncpa %s16, 0
    %18 = vsyncpa [#allocation5], 0
    loop: start=0, step=1, limit=10
    $region2: #{tpu_custom_call.1} parent=1 // loop_pre_header
      _
    $region3: #{tpu_custom_call.1} parent=1 // loop_header
      %s20 = sphi 0, %s24
      %p21 = scmp.ge.s32.totalorder %s20, 10
      %s30 = sphi 0, %s32
      %s33 = sphi 0, %s30
      %s34 = sphi 0, %s33
      %s50 = sphi 0, %s34
      %s56 = sphi 0, %s58
      %s59 = sphi 0, %s56
      %s60 = sphi 0, %s59
      %s76 = sphi 0, %s60
      %s80 = sphi 0, %s80
      %s82 = sphi 0, %s80
      %s83 = sphi 0, %s82
      %s97 = sphi 0, %s83
      %s101 = sphi 0, %s101
      %s103 = sphi 0, %s101
      %s104 = sphi 0, %s103
      %s118 = sphi 0, %s104
      %s122 = sphi 0, %s122
      %s124 = sphi 0, %s122
      %s125 = sphi 0, %s124
      %s139 = sphi 0, %s125
      %s143 = sphi 0, %s143
      %s145 = sphi 0, %s143
      %s146 = sphi 0, %s145
      %s160 = sphi 0, %s146
      %s164 = sphi 0, %s164
      %s166 = sphi 0, %s164
      %s167 = sphi 0, %s166
      %s181 = sphi 0, %s167
      %s185 = sphi 0, %s185
      %s187 = sphi 0, %s185
      %s188 = sphi 0, %s187
      %s202 = sphi 0, %s188
      %s206 = sphi 0, %s206
      %s208 = sphi 0, %s206
      %s209 = sphi 0, %s208
      %s223 = sphi 0, %s209
      %s227 = sphi 0, %s227
      %s229 = sphi 0, %s227
      %s230 = sphi 0, %s229
      %s244 = sphi 0, %s230
      %s250 = sphi 0, %s252
      %s253 = sphi 0, %s250
      %s254 = sphi 0, %s253
      %s270 = sphi 0, %s254
    $region4: #{tpu_custom_call.1} parent=1 // loop_header_branch
      %23 = sbr.rel (%p21) target = $region8
    $region5: #{tpu_custom_call.1} parent=1 // loop_body
      %s25 = ssub.s32 %s20, 1
      %s26 = ssub.s32 %s20, 2
      %s27 = sadd.s32 %s20, 1
      %s28 = ssub.s32 %s20, %s27
      %p29 = scmp.eq.s32.totalorder %s28, 0
      %s31 = sadd.s32 %s30, 1
      %s32 = scalar_select %p29, %s30, %s31
      %p35 = pneg %p29
      %p36 = scmp.eq.s32.totalorder %s20, 7
      %p37 = por %p35, %p36
      %p38 = scmp.ne.s32.totalorder %s30, %s33
      %p39 = scmp.eq.s32.totalorder %s20, 0
      %p40 = por %p38, %p39
      %p41 = scmp.ne.s32.totalorder %s30, %s33
      %p42 = scmp.eq.s32.totalorder %s25, 7
      %p43 = por %p41, %p42
      %p44 = scmp.ne.s32.totalorder %s33, %s34
      %p45 = scmp.eq.s32.totalorder %s25, 0
      %p46 = por %p44, %p45
      %p47 = scmp.ne.s32.totalorder %s33, %s34
      %p48 = scmp.eq.s32.totalorder %s26, 7
      %p49 = por %p47, %p48
      %p51 = scmp.ne.s32.totalorder %s34, %s50
      %p52 = scmp.eq.s32.totalorder %s26, 0
      %p53 = por %p51, %p52
      %s54 = ssub.s32 %s20, %s27
      %p55 = scmp.eq.s32.totalorder %s54, 0
      %s57 = sadd.s32 %s56, 1
      %s58 = scalar_select %p55, %s56, %s57
      %p61 = pneg %p55
      %p62 = scmp.eq.s32.totalorder %s20, 7
      %p63 = por %p61, %p62
      %p64 = scmp.ne.s32.totalorder %s56, %s59
      %p65 = scmp.eq.s32.totalorder %s20, 0
      %p66 = por %p64, %p65
      %p67 = scmp.ne.s32.totalorder %s56, %s59
      %p68 = scmp.eq.s32.totalorder %s25, 7
      %p69 = por %p67, %p68
      %p70 = scmp.ne.s32.totalorder %s59, %s60
      %p71 = scmp.eq.s32.totalorder %s25, 0
      %p72 = por %p70, %p71
      %p73 = scmp.ne.s32.totalorder %s59, %s60
      %p74 = scmp.eq.s32.totalorder %s26, 7
      %p75 = por %p73, %p74
      %p77 = scmp.ne.s32.totalorder %s60, %s76
      %p78 = scmp.eq.s32.totalorder %s26, 0
      %p79 = por %p77, %p78
      %s81 = sadd.s32 %s80, 1
      %p84 = scmp.eq.s32.totalorder %s20, 7
      %p85 = scmp.ne.s32.totalorder %s80, %s82
      %p86 = scmp.eq.s32.totalorder %s20, 0
      %p87 = por %p85, %p86
      %p88 = scmp.ne.s32.totalorder %s80, %s82
      %p89 = scmp.eq.s32.totalorder %s25, 7
      %p90 = por %p88, %p89
      %p91 = scmp.ne.s32.totalorder %s82, %s83
      %p92 = scmp.eq.s32.totalorder %s25, 0
      %p93 = por %p91, %p92
      %p94 = scmp.ne.s32.totalorder %s82, %s83
      %p95 = scmp.eq.s32.totalorder %s26, 7
      %p96 = por %p94, %p95
      %p98 = scmp.ne.s32.totalorder %s83, %s97
      %p99 = scmp.eq.s32.totalorder %s26, 0
      %p100 = por %p98, %p99
      %s102 = sadd.s32 %s101, 1
      %p105 = scmp.eq.s32.totalorder %s20, 7
      %p106 = scmp.ne.s32.totalorder %s101, %s103
      %p107 = scmp.eq.s32.totalorder %s20, 0
      %p108 = por %p106, %p107
      %p109 = scmp.ne.s32.totalorder %s101, %s103
      %p110 = scmp.eq.s32.totalorder %s25, 7
      %p111 = por %p109, %p110
      %p112 = scmp.ne.s32.totalorder %s103, %s104
      %p113 = scmp.eq.s32.totalorder %s25, 0
      %p114 = por %p112, %p113
      %p115 = scmp.ne.s32.totalorder %s103, %s104
      %p116 = scmp.eq.s32.totalorder %s26, 7
      %p117 = por %p115, %p116
      %p119 = scmp.ne.s32.totalorder %s104, %s118
      %p120 = scmp.eq.s32.totalorder %s26, 0
      %p121 = por %p119, %p120
      %s123 = sadd.s32 %s122, 1
      %p126 = scmp.eq.s32.totalorder %s20, 7
      %p127 = scmp.ne.s32.totalorder %s122, %s124
      %p128 = scmp.eq.s32.totalorder %s20, 0
      %p129 = por %p127, %p128
      %p130 = scmp.ne.s32.totalorder %s122, %s124
      %p131 = scmp.eq.s32.totalorder %s25, 7
      %p132 = por %p130, %p131
      %p133 = scmp.ne.s32.totalorder %s124, %s125
      %p134 = scmp.eq.s32.totalorder %s25, 0
      %p135 = por %p133, %p134
      %p136 = scmp.ne.s32.totalorder %s124, %s125
      %p137 = scmp.eq.s32.totalorder %s26, 7
      %p138 = por %p136, %p137
      %p140 = scmp.ne.s32.totalorder %s125, %s139
      %p141 = scmp.eq.s32.totalorder %s26, 0
      %p142 = por %p140, %p141
      %s144 = sadd.s32 %s143, 1
      %p147 = scmp.eq.s32.totalorder %s20, 7
      %p148 = scmp.ne.s32.totalorder %s143, %s145
      %p149 = scmp.eq.s32.totalorder %s20, 0
      %p150 = por %p148, %p149
      %p151 = scmp.ne.s32.totalorder %s143, %s145
      %p152 = scmp.eq.s32.totalorder %s25, 7
      %p153 = por %p151, %p152
      %p154 = scmp.ne.s32.totalorder %s145, %s146
      %p155 = scmp.eq.s32.totalorder %s25, 0
      %p156 = por %p154, %p155
      %p157 = scmp.ne.s32.totalorder %s145, %s146
      %p158 = scmp.eq.s32.totalorder %s26, 7
      %p159 = por %p157, %p158
      %p161 = scmp.ne.s32.totalorder %s146, %s160
      %p162 = scmp.eq.s32.totalorder %s26, 0
      %p163 = por %p161, %p162
      %s165 = sadd.s32 %s164, 1
      %p168 = scmp.eq.s32.totalorder %s20, 7
      %p169 = scmp.ne.s32.totalorder %s164, %s166
      %p170 = scmp.eq.s32.totalorder %s20, 0
      %p171 = por %p169, %p170
      %p172 = scmp.ne.s32.totalorder %s164, %s166
      %p173 = scmp.eq.s32.totalorder %s25, 7
      %p174 = por %p172, %p173
      %p175 = scmp.ne.s32.totalorder %s166, %s167
      %p176 = scmp.eq.s32.totalorder %s25, 0
      %p177 = por %p175, %p176
      %p178 = scmp.ne.s32.totalorder %s166, %s167
      %p179 = scmp.eq.s32.totalorder %s26, 7
      %p180 = por %p178, %p179
      %p182 = scmp.ne.s32.totalorder %s167, %s181
      %p183 = scmp.eq.s32.totalorder %s26, 0
      %p184 = por %p182, %p183
      %s186 = sadd.s32 %s185, 1
      %p189 = scmp.eq.s32.totalorder %s20, 7
      %p190 = scmp.ne.s32.totalorder %s185, %s187
      %p191 = scmp.eq.s32.totalorder %s20, 0
      %p192 = por %p190, %p191
      %p193 = scmp.ne.s32.totalorder %s185, %s187
      %p194 = scmp.eq.s32.totalorder %s25, 7
      %p195 = por %p193, %p194
      %p196 = scmp.ne.s32.totalorder %s187, %s188
      %p197 = scmp.eq.s32.totalorder %s25, 0
      %p198 = por %p196, %p197
      %p199 = scmp.ne.s32.totalorder %s187, %s188
      %p200 = scmp.eq.s32.totalorder %s26, 7
      %p201 = por %p199, %p200
      %p203 = scmp.ne.s32.totalorder %s188, %s202
      %p204 = scmp.eq.s32.totalorder %s26, 0
      %p205 = por %p203, %p204
      %s207 = sadd.s32 %s206, 1
      %p210 = scmp.eq.s32.totalorder %s20, 7
      %p211 = scmp.ne.s32.totalorder %s206, %s208
      %p212 = scmp.eq.s32.totalorder %s20, 0
      %p213 = por %p211, %p212
      %p214 = scmp.ne.s32.totalorder %s206, %s208
      %p215 = scmp.eq.s32.totalorder %s25, 7
      %p216 = por %p214, %p215
      %p217 = scmp.ne.s32.totalorder %s208, %s209
      %p218 = scmp.eq.s32.totalorder %s25, 0
      %p219 = por %p217, %p218
      %p220 = scmp.ne.s32.totalorder %s208, %s209
      %p221 = scmp.eq.s32.totalorder %s26, 7
      %p222 = por %p220, %p221
      %p224 = scmp.ne.s32.totalorder %s209, %s223
      %p225 = scmp.eq.s32.totalorder %s26, 0
      %p226 = por %p224, %p225
      %s228 = sadd.s32 %s227, 1
      %p231 = scmp.eq.s32.totalorder %s20, 7
      %p232 = scmp.ne.s32.totalorder %s227, %s229
      %p233 = scmp.eq.s32.totalorder %s20, 0
      %p234 = por %p232, %p233
      %p235 = scmp.ne.s32.totalorder %s227, %s229
      %p236 = scmp.eq.s32.totalorder %s25, 7
      %p237 = por %p235, %p236
      %p238 = scmp.ne.s32.totalorder %s229, %s230
      %p239 = scmp.eq.s32.totalorder %s25, 0
      %p240 = por %p238, %p239
      %p241 = scmp.ne.s32.totalorder %s229, %s230
      %p242 = scmp.eq.s32.totalorder %s26, 7
      %p243 = por %p241, %p242
      %p245 = scmp.ne.s32.totalorder %s230, %s244
      %p246 = scmp.eq.s32.totalorder %s26, 0
      %p247 = por %p245, %p246
      %s248 = ssub.s32 %s20, %s27
      %p249 = scmp.eq.s32.totalorder %s248, 0
      %s251 = sadd.s32 %s250, 1
      %s252 = scalar_select %p249, %s250, %s251
      %p255 = pneg %p249
      %p256 = scmp.eq.s32.totalorder %s20, 7
      %p257 = por %p255, %p256
      %p258 = scmp.ne.s32.totalorder %s250, %s253
      %p259 = scmp.eq.s32.totalorder %s20, 0
      %p260 = por %p258, %p259
      %p261 = scmp.ne.s32.totalorder %s250, %s253
      %p262 = scmp.eq.s32.totalorder %s25, 7
      %p263 = por %p261, %p262
      %p264 = scmp.ne.s32.totalorder %s253, %s254
      %p265 = scmp.eq.s32.totalorder %s25, 0
      %p266 = por %p264, %p265
      %p267 = scmp.ne.s32.totalorder %s253, %s254
      %p268 = scmp.eq.s32.totalorder %s26, 7
      %p269 = por %p267, %p268
      %p271 = scmp.ne.s32.totalorder %s254, %s270
      %p272 = scmp.eq.s32.totalorder %s26, 0
      %p273 = por %p271, %p272
      %p274 = scmp.le.s32.totalorder 1, %s20
      %p275 = scmp.lt.s32.totalorder %s20, 9
      %p276 = pnand %p274, %p275
      %p277 = pneg %p276
      // Predicated region
      $region9: #{tpu_custom_call.1} parent=5 // pred_check
        _
      $region10: #{tpu_custom_call.1} parent=5 // pred_check_branch
        %279 = sbr.rel (%p276) target = $region12
      $region11: #{tpu_custom_call.1} parent=5 // pred_region
        %s280 = ssub.s32 %s20, 1
        // Predicated region
        $region13: #{tpu_custom_call.1} parent=11 // pred_check
          %p281 = pneg %p93
        $region14: #{tpu_custom_call.1} parent=11 // pred_check_branch
          %283 = sbr.rel (%p281) target = $region16
        $region15: #{tpu_custom_call.1} parent=11 // pred_region
          %s285 = ssub.s32 128, 128
          %286 = vsyncadd [#allocation5], %s285
          %s287 = sshll.u32 [#allocation4], 4
          %s288 = int_to_ptr.vmem [resolvable:$true] %s287
          %293 = dma.hbm_to_vmem [thread:$0]  %s2, 128, %s288, [#allocation5], 64, 64, 4
        $region16: #{tpu_custom_call.1} parent=11 // pred_fallthru
          _
        // Predicated region
        $region17: #{tpu_custom_call.1} parent=11 // pred_check
          %p294 = pneg %p114
        $region18: #{tpu_custom_call.1} parent=11 // pred_check_branch
          %296 = sbr.rel (%p294) target = $region20
        $region19: #{tpu_custom_call.1} parent=11 // pred_region
          _
        $region20: #{tpu_custom_call.1} parent=11 // pred_fallthru
          _
        // Predicated region
        $region21: #{tpu_custom_call.1} parent=11 // pred_check
          %p297 = pneg %p135
        $region22: #{tpu_custom_call.1} parent=11 // pred_check_branch
          %299 = sbr.rel (%p297) target = $region24
        $region23: #{tpu_custom_call.1} parent=11 // pred_region
          _
        $region24: #{tpu_custom_call.1} parent=11 // pred_fallthru
          _
        // Predicated region
        $region25: #{tpu_custom_call.1} parent=11 // pred_check
          %p300 = pneg %p156
        $region26: #{tpu_custom_call.1} parent=11 // pred_check_branch
          %302 = sbr.rel (%p300) target = $region28
        $region27: #{tpu_custom_call.1} parent=11 // pred_region
          _
        $region28: #{tpu_custom_call.1} parent=11 // pred_fallthru
          _
        // Predicated region
        $region29: #{tpu_custom_call.1} parent=11 // pred_check
          %p303 = pneg %p177
        $region30: #{tpu_custom_call.1} parent=11 // pred_check_branch
          %305 = sbr.rel (%p303) target = $region32
        $region31: #{tpu_custom_call.1} parent=11 // pred_region
          _
        $region32: #{tpu_custom_call.1} parent=11 // pred_fallthru
          _
        // Predicated region
        $region33: #{tpu_custom_call.1} parent=11 // pred_check
          %p306 = pneg %p198
        $region34: #{tpu_custom_call.1} parent=11 // pred_check_branch
          %308 = sbr.rel (%p306) target = $region36
        $region35: #{tpu_custom_call.1} parent=11 // pred_region
          _
        $region36: #{tpu_custom_call.1} parent=11 // pred_fallthru
          _
        // Predicated region
        $region37: #{tpu_custom_call.1} parent=11 // pred_check
          %p309 = pneg %p219
        $region38: #{tpu_custom_call.1} parent=11 // pred_check_branch
          %311 = sbr.rel (%p309) target = $region40
        $region39: #{tpu_custom_call.1} parent=11 // pred_region
          _
        $region40: #{tpu_custom_call.1} parent=11 // pred_fallthru
          _
        // Predicated region
        $region41: #{tpu_custom_call.1} parent=11 // pred_check
          %p312 = pneg %p240
        $region42: #{tpu_custom_call.1} parent=11 // pred_check_branch
          %314 = sbr.rel (%p312) target = $region44
        $region43: #{tpu_custom_call.1} parent=11 // pred_region
          _
        $region44: #{tpu_custom_call.1} parent=11 // pred_fallthru
          _
      $region12: #{tpu_custom_call.1} parent=5 // pred_fallthru
        _
      %p315 = scmp.lt.s32.totalorder %s20, 8
      // Predicated region
      $region45: #{tpu_custom_call.1} parent=5 // pred_check
        %p316 = pneg %p315
      $region46: #{tpu_custom_call.1} parent=5 // pred_check_branch
        %318 = sbr.rel (%p316) target = $region48
      $region47: #{tpu_custom_call.1} parent=5 // pred_region
        // Predicated region
        $region49: #{tpu_custom_call.1} parent=47 // pred_check
          %p319 = pneg %p40
        $region50: #{tpu_custom_call.1} parent=47 // pred_check_branch
          %321 = sbr.rel (%p319) target = $region52
        $region51: #{tpu_custom_call.1} parent=47 // pred_region
          %p322 = scmp.lt.s32.totalorder %s20, 7
          %s323 = scalar_select %p322, %s20, 7
          %s324 = smul.addr %s323, 2
          %s325 = smul.addr %s324, 4
          %s326 = scalar_lea.vmem %s0, %s325
        $region52: #{tpu_custom_call.1} parent=47 // pred_fallthru
          _
        // Predicated region
        $region53: #{tpu_custom_call.1} parent=47 // pred_check
          %p327 = pneg %p66
        $region54: #{tpu_custom_call.1} parent=47 // pred_check_branch
          %329 = sbr.rel (%p327) target = $region56
        $region55: #{tpu_custom_call.1} parent=47 // pred_region
          %s330 = sand.u32 %s56, 1
          %s331 = scalar_lea.sflag [#allocation3], %s330
          %s332 = sand.u32 %s56, 1
          %s333 = smul.addr %s332, 8
          %s334 = scalar_lea.vmem [#allocation2], %s333
          %s336 = ssub.s32 128, 128
          %337 = vsyncadd %s331, %s336
          %s338 = smul.addr %s20, 2
          %s339 = smul.addr %s338, 64
          %s340 = scalar_lea.hbm %s1, %s339
          %s341 = sshll.u32 %s334, 4
          %s342 = int_to_ptr.vmem [resolvable:$true] %s341
          %347 = dma.hbm_to_vmem [thread:$0]  %s340, 128, %s342, %s331, 64, 64, 4
        $region56: #{tpu_custom_call.1} parent=47 // pred_fallthru
          _
      $region48: #{tpu_custom_call.1} parent=5 // pred_fallthru
        _
      %p348 = scmp.le.s32.totalorder 1, %s20
      %p349 = scmp.lt.s32.totalorder %s20, 9
      %p350 = pnand %p348, %p349
      %p351 = pneg %p350
      // Predicated region
      $region57: #{tpu_custom_call.1} parent=5 // pred_check
        _
      $region58: #{tpu_custom_call.1} parent=5 // pred_check_branch
        %353 = sbr.rel (%p350) target = $region60
      $region59: #{tpu_custom_call.1} parent=5 // pred_region
        %s354 = ssub.s32 %s20, 1
        %s355 = sand.u32 %s59, 1
        %s356 = scalar_lea.sflag [#allocation3], %s355
        %s357 = sand.u32 %s59, 1
        %s358 = smul.addr %s357, 8
        %s359 = scalar_lea.vmem [#allocation2], %s358
        // Predicated region
        $region61: #{tpu_custom_call.1} parent=59 // pred_check
          %p360 = pneg %p72
        $region62: #{tpu_custom_call.1} parent=59 // pred_check_branch
          %362 = sbr.rel (%p360) target = $region64
        $region63: #{tpu_custom_call.1} parent=59 // pred_region
          %363 = dma.done %s356, 128
        $region64: #{tpu_custom_call.1} parent=59 // pred_fallthru
          _
        // Predicated region
        $region65: #{tpu_custom_call.1} parent=59 // pred_check
          %p364 = pneg %p93
        $region66: #{tpu_custom_call.1} parent=59 // pred_check_branch
          %366 = sbr.rel (%p364) target = $region68
        $region67: #{tpu_custom_call.1} parent=59 // pred_region
          %367 = dma.done [#allocation5], 128
        $region68: #{tpu_custom_call.1} parent=59 // pred_fallthru
          _
        %p368 = scmp.lt.s32.totalorder %s25, 7
        %s369 = scalar_select %p368, %s25, 7
        %s370 = smul.addr %s369, 2
        %s371 = smul.addr %s370, 4
        %s372 = scalar_lea.vmem %s0, %s371
        %p373 = pneg %p46
        %p374 = pneg %p43
        %s375 = sand.u32 %s59, 1
        %s376 = scalar_lea.sflag [#allocation3], %s375
        %s377 = sand.u32 %s59, 1
        %s378 = smul.addr %s377, 8
        %s379 = scalar_lea.vmem [#allocation2], %s378
        %p380 = pneg %p72
        %p381 = pneg %p69
        %p382 = pneg %p93
        %p383 = pneg %p90
        %p384 = pneg %p114
        %p385 = pneg %p111
        %p386 = pneg %p135
        %p387 = pneg %p132
        %p388 = pneg %p156
        %p389 = pneg %p153
        %p390 = pneg %p177
        %p391 = pneg %p174
        %p392 = pneg %p198
        %p393 = pneg %p195
        %p394 = pneg %p219
        %p395 = pneg %p216
        %p396 = pneg %p240
        %p397 = pneg %p237
        %p398 = pneg %p266
        %p399 = pneg %p263
        %p400 = scmp.lt.s32.totalorder %s25, 7
        %s401 = scalar_select %p400, %s25, 7
        %s402 = smul.addr %s401, 2
        %s403 = smul.addr %s402, 8
        %s404 = scalar_lea.vmem %s10, %s403
        %p405 = scmp.lt.s32.totalorder %s25, 7
        %s406 = scalar_select %p405, %s25, 7
        %s407 = smul.addr %s406, 2
        %s408 = smul.addr %s407, 4
        %s409 = scalar_lea.vmem %s0, %s408
        %p410 = scmp.lt.s32.totalorder %s25, 7
        %s411 = scalar_select %p410, %s25, 7
        %s412 = smul.addr %s411, 2
        %s413 = smul.addr %s412, 8
        %s414 = scalar_lea.vmem %s10, %s413
        %v416 = vld [vmem:[%s409] sm:$0xf]
        %v417 = vld [vmem:[%s409 + $0x4] sm:$0xf]
        %v418 = vld [vmem:[%s359] sm:$0xf]
        %v419 = vld [vmem:[%s359 + $0x4] sm:$0xf]
        %v420 = vld [vmem:[#allocation4] sm:$0xf]
        %v421 = vld [vmem:[#allocation4 + $0x4] sm:$0xf]
        %v424 = vunpack.c.l.b16 %v418
        %v425 = vunpack.c.l.b16 %v419
        %v426 = vpack.c.b16 %v425, %v424
        %v429 = vunpack.c.l.b16 %v420
        %v430 = vunpack.c.l.b16 %v421
        %v431 = vpack.c.b16 %v430, %v429
        %vm433 = vcmask 130048
        %v435 = vsel %vm433, %v426, 0
        %437 = vmatprep.subr.bf16.mxu0 0
        %438 = vmatpush1.bf16.msra.mxu0 %v431
        %439 = vmatprep.subr.bf16.mxu0 0
        %440 = vmatpush1.bf16.msra.mxu0 0
        %441 = vmatprep.subr.bf16.mxu0 0
        %442 = vmatpush1.bf16.msra.mxu0 0
        %443 = vmatprep.subr.bf16.mxu0 0
        %444 = vmatpush1.bf16.msra.mxu0 0
        %445 = vmatprep.subr.bf16.mxu0 0
        %446 = vmatpush1.bf16.msra.mxu0 0
        %447 = vmatprep.subr.bf16.mxu0 0
        %448 = vmatpush1.bf16.msra.mxu0 0
        %449 = vmatprep.subr.bf16.mxu0 0
        %450 = vmatpush1.bf16.msra.mxu0 0
        %451 = vmatprep.subr.bf16.mxu0 0
        %452 = vmatpush1.bf16.msra.mxu0 0
        %453 = vmatprep.subr.bf16.mxu0 0
        %454 = vmatpush1.bf16.msra.mxu0 0
        %455 = vmatprep.subr.bf16.mxu0 0
        %456 = vmatpush1.bf16.msra.mxu0 0
        %457 = vmatprep.subr.bf16.mxu0 0
        %458 = vmatpush1.bf16.msra.mxu0 0
        %459 = vmatprep.subr.bf16.mxu0 0
        %460 = vmatpush1.bf16.msra.mxu0 0
        %461 = vmatprep.subr.bf16.mxu0 0
        %462 = vmatpush1.bf16.msra.mxu0 0
        %463 = vmatprep.subr.bf16.mxu0 0
        %464 = vmatpush1.bf16.msra.mxu0 0
        %465 = vmatprep.subr.bf16.mxu0 0
        %466 = vmatpush1.bf16.msra.mxu0 0
        %467 = vmatprep.subr.bf16.mxu0 0
        %468 = vmatpush1.bf16.msra.mxu0 0
        %469 = vmatprep.mubr.bf16.mxu0 0
        %470 = vmatmul.mubr.bf16.gmra.mrb[0].mxu0 %v435
        %v471 = vpop.f32.mrb[0].mxu0
        %v472 = vadd.f32 0.0, %v471
        %v473 = vpop.f32.mrb[0].mxu0
        %v474 = vpop.f32.mrb[0].mxu0
        %v475 = vadd.f32 0.0, %v474
        %v476 = vpop.f32.mrb[0].mxu0
        %477 = vdwg.mxu0
        %v478 = vpack.c.bf16 %v475, %v472
        %v479 = vld [vmem:[%s3] sm:$0x1]
        %v481 = vlaneseq
        %v482 = vshrl.u32 %v481, 7
        %v483 = vsub.s32 0, %v482
        %v484 = vrot.slane %v479, %v483
        %v488 = vunpack.c.l.b16 %v416
        %v489 = vunpack.c.l.b16 %v417
        %v490 = vpack.c.b16 %v489, %v488
        %v492 = vsel %vm433, %v490, 0
        %494 = vmatprep.subr.bf16.mxu0 0
        %495 = vmatpush1.bf16.msra.mxu0 %v478
        %496 = vmatprep.subr.bf16.mxu0 0
        %497 = vmatpush1.bf16.msra.mxu0 0
        %498 = vmatprep.subr.bf16.mxu0 0
        %499 = vmatpush1.bf16.msra.mxu0 0
        %500 = vmatprep.subr.bf16.mxu0 0
        %501 = vmatpush1.bf16.msra.mxu0 0
        %502 = vmatprep.subr.bf16.mxu0 0
        %503 = vmatpush1.bf16.msra.mxu0 0
        %504 = vmatprep.subr.bf16.mxu0 0
        %505 = vmatpush1.bf16.msra.mxu0 0
        %506 = vmatprep.subr.bf16.mxu0 0
        %507 = vmatpush1.bf16.msra.mxu0 0
        %508 = vmatprep.subr.bf16.mxu0 0
        %509 = vmatpush1.bf16.msra.mxu0 0
        %510 = vmatprep.subr.bf16.mxu0 0
        %511 = vmatpush1.bf16.msra.mxu0 0
        %512 = vmatprep.subr.bf16.mxu0 0
        %513 = vmatpush1.bf16.msra.mxu0 0
        %514 = vmatprep.subr.bf16.mxu0 0
        %515 = vmatpush1.bf16.msra.mxu0 0
        %516 = vmatprep.subr.bf16.mxu0 0
        %517 = vmatpush1.bf16.msra.mxu0 0
        %518 = vmatprep.subr.bf16.mxu0 0
        %519 = vmatpush1.bf16.msra.mxu0 0
        %520 = vmatprep.subr.bf16.mxu0 0
        %521 = vmatpush1.bf16.msra.mxu0 0
        %522 = vmatprep.subr.bf16.mxu0 0
        %523 = vmatpush1.bf16.msra.mxu0 0
        %524 = vmatprep.subr.bf16.mxu0 0
        %525 = vmatpush1.bf16.msra.mxu0 0
        %526 = vmatprep.mubr.bf16.mxu0 0
        %527 = vmatmul.mubr.bf16.gmra.mrb[0].mxu0 %v492
        %v528 = vpop.f32.mrb[0].mxu0
        %v529 = vadd.f32 %v484, %v528
        %v530 = vpop.f32.mrb[0].mxu0
        %v531 = vpop.f32.mrb[0].mxu0
        %v532 = vadd.f32 %v484, %v531
        %v533 = vpop.f32.mrb[0].mxu0
        %534 = vdwg.mxu0
        %v535 = vmax.f32 %v529, 0.0
        %v536 = vmax.f32 %v532, 0.0
        %v537 = vpack.c.bf16 %v536, %v535
        %v538 = vld [vmem:[%s4] sm:$0xf]
        %v539 = vld [vmem:[%s4 + $0x4] sm:$0xf]
        %v540 = vld [vmem:[%s4 + $0x8] sm:$0xf]
        %v541 = vld [vmem:[%s4 + $0xc] sm:$0xf]
        %v542 = vld [vmem:[%s4 + $0x10] sm:$0xf]
        %v543 = vld [vmem:[%s4 + $0x14] sm:$0xf]
        %v544 = vld [vmem:[%s4 + $0x18] sm:$0xf]
        %v545 = vld [vmem:[%s4 + $0x1c] sm:$0xf]
        %v554 = vunpack.c.l.b16 %v538
        %v555 = vunpack.c.l.b16 %v539
        %v556 = vunpack.c.l.b16 %v540
        %v557 = vunpack.c.l.b16 %v541
        %v558 = vunpack.c.l.b16 %v542
        %v559 = vunpack.c.l.b16 %v543
        %v560 = vunpack.c.l.b16 %v544
        %v561 = vunpack.c.l.b16 %v545
        %v562 = vpack.c.b16 %v555, %v554
        %v563 = vpack.c.b16 %v557, %v556
        %v564 = vpack.c.b16 %v559, %v558
        %v565 = vpack.c.b16 %v561, %v560
        %vm570 = vcmask 523264
        %v572 = vsel %vm570, %v537, 0
        %574 = vmatprep.subr.bf16.mxu0 0
        %575 = vmatpush1.bf16.msra.mxu0 %v562
        %576 = vmatprep.subr.bf16.mxu0 0
        %577 = vmatpush1.bf16.msra.mxu0 %v563
        %578 = vmatprep.subr.bf16.mxu0 0
        %579 = vmatpush1.bf16.msra.mxu0 %v564
        %580 = vmatprep.subr.bf16.mxu0 0
        %581 = vmatpush1.bf16.msra.mxu0 %v565
        %582 = vmatprep.subr.bf16.mxu0 0
        %583 = vmatpush1.bf16.msra.mxu0 0
        %584 = vmatprep.subr.bf16.mxu0 0
        %585 = vmatpush1.bf16.msra.mxu0 0
        %586 = vmatprep.subr.bf16.mxu0 0
        %587 = vmatpush1.bf16.msra.mxu0 0
        %588 = vmatprep.subr.bf16.mxu0 0
        %589 = vmatpush1.bf16.msra.mxu0 0
        %590 = vmatprep.subr.bf16.mxu0 0
        %591 = vmatpush1.bf16.msra.mxu0 0
        %592 = vmatprep.subr.bf16.mxu0 0
        %593 = vmatpush1.bf16.msra.mxu0 0
        %594 = vmatprep.subr.bf16.mxu0 0
        %595 = vmatpush1.bf16.msra.mxu0 0
        %596 = vmatprep.subr.bf16.mxu0 0
        %597 = vmatpush1.bf16.msra.mxu0 0
        %598 = vmatprep.subr.bf16.mxu0 0
        %599 = vmatpush1.bf16.msra.mxu0 0
        %600 = vmatprep.subr.bf16.mxu0 0
        %601 = vmatpush1.bf16.msra.mxu0 0
        %602 = vmatprep.subr.bf16.mxu0 0
        %603 = vmatpush1.bf16.msra.mxu0 0
        %604 = vmatprep.subr.bf16.mxu0 0
        %605 = vmatpush1.bf16.msra.mxu0 0
        %606 = vmatprep.mubr.bf16.mxu0 0
        %607 = vmatmul.mubr.bf16.gmra.mrb[0].mxu0 %v572
        %v608 = vpop.f32.mrb[0].mxu0
        %v609 = vadd.f32 0.0, %v608
        %v610 = vpop.f32.mrb[0].mxu0
        %v611 = vpop.f32.mrb[0].mxu0
        %v612 = vadd.f32 0.0, %v611
        %v613 = vpop.f32.mrb[0].mxu0
        %614 = vdwg.mxu0
        %v615 = vpack.c.bf16 %v612, %v609
        %v616 = vld [vmem:[%s5] sm:$0x1]
        %v618 = vlaneseq
        %v619 = vshrl.u32 %v618, 7
        %v620 = vsub.s32 0, %v619
        %v621 = vrot.slane %v616, %v620
        %623 = vmatprep.subr.bf16.mxu0 0
        %624 = vmatpush1.bf16.msra.mxu0 %v615
        %625 = vmatprep.subr.bf16.mxu0 0
        %626 = vmatpush1.bf16.msra.mxu0 0
        %627 = vmatprep.subr.bf16.mxu0 0
        %628 = vmatpush1.bf16.msra.mxu0 0
        %629 = vmatprep.subr.bf16.mxu0 0
        %630 = vmatpush1.bf16.msra.mxu0 0
        %631 = vmatprep.subr.bf16.mxu0 0
        %632 = vmatpush1.bf16.msra.mxu0 0
        %633 = vmatprep.subr.bf16.mxu0 0
        %634 = vmatpush1.bf16.msra.mxu0 0
        %635 = vmatprep.subr.bf16.mxu0 0
        %636 = vmatpush1.bf16.msra.mxu0 0
        %637 = vmatprep.subr.bf16.mxu0 0
        %638 = vmatpush1.bf16.msra.mxu0 0
        %639 = vmatprep.subr.bf16.mxu0 0
        %640 = vmatpush1.bf16.msra.mxu0 0
        %641 = vmatprep.subr.bf16.mxu0 0
        %642 = vmatpush1.bf16.msra.mxu0 0
        %643 = vmatprep.subr.bf16.mxu0 0
        %644 = vmatpush1.bf16.msra.mxu0 0
        %645 = vmatprep.subr.bf16.mxu0 0
        %646 = vmatpush1.bf16.msra.mxu0 0
        %647 = vmatprep.subr.bf16.mxu0 0
        %648 = vmatpush1.bf16.msra.mxu0 0
        %649 = vmatprep.subr.bf16.mxu0 0
        %650 = vmatpush1.bf16.msra.mxu0 0
        %651 = vmatprep.subr.bf16.mxu0 0
        %652 = vmatpush1.bf16.msra.mxu0 0
        %653 = vmatprep.subr.bf16.mxu0 0
        %654 = vmatpush1.bf16.msra.mxu0 0
        %655 = vmatprep.mubr.bf16.mxu0 0
        %656 = vmatmul.mubr.bf16.gmra.mrb[0].mxu0 %v492
        %v657 = vpop.f32.mrb[0].mxu0
        %v658 = vadd.f32 %v621, %v657
        %v659 = vpop.f32.mrb[0].mxu0
        %v660 = vpop.f32.mrb[0].mxu0
        %v661 = vadd.f32 %v621, %v660
        %v662 = vpop.f32.mrb[0].mxu0
        %663 = vdwg.mxu0
        %v664 = vmax.f32 %v658, 0.0
        %v665 = vmax.f32 %v661, 0.0
        %v666 = vpack.c.bf16 %v665, %v664
        %v667 = vld [vmem:[%s6] sm:$0xf]
        %v668 = vld [vmem:[%s6 + $0x4] sm:$0xf]
        %v669 = vld [vmem:[%s6 + $0x8] sm:$0xf]
        %v670 = vld [vmem:[%s6 + $0xc] sm:$0xf]
        %v675 = vunpack.c.l.b16 %v667
        %v676 = vunpack.c.l.b16 %v668
        %v677 = vunpack.c.l.b16 %v669
        %v678 = vunpack.c.l.b16 %v670
        %v679 = vpack.c.b16 %v676, %v675
        %v680 = vpack.c.b16 %v678, %v677
        %vm683 = vcmask 261120
        %v685 = vsel %vm683, %v666, 0
        %687 = vmatprep.subr.bf16.mxu0 0
        %688 = vmatpush1.bf16.msra.mxu0 %v679
        %689 = vmatprep.subr.bf16.mxu0 0
        %690 = vmatpush1.bf16.msra.mxu0 %v680
        %691 = vmatprep.subr.bf16.mxu0 0
        %692 = vmatpush1.bf16.msra.mxu0 0
        %693 = vmatprep.subr.bf16.mxu0 0
        %694 = vmatpush1.bf16.msra.mxu0 0
        %695 = vmatprep.subr.bf16.mxu0 0
        %696 = vmatpush1.bf16.msra.mxu0 0
        %697 = vmatprep.subr.bf16.mxu0 0
        %698 = vmatpush1.bf16.msra.mxu0 0
        %699 = vmatprep.subr.bf16.mxu0 0
        %700 = vmatpush1.bf16.msra.mxu0 0
        %701 = vmatprep.subr.bf16.mxu0 0
        %702 = vmatpush1.bf16.msra.mxu0 0
        %703 = vmatprep.subr.bf16.mxu0 0
        %704 = vmatpush1.bf16.msra.mxu0 0
        %705 = vmatprep.subr.bf16.mxu0 0
        %706 = vmatpush1.bf16.msra.mxu0 0
        %707 = vmatprep.subr.bf16.mxu0 0
        %708 = vmatpush1.bf16.msra.mxu0 0
        %709 = vmatprep.subr.bf16.mxu0 0
        %710 = vmatpush1.bf16.msra.mxu0 0
        %711 = vmatprep.subr.bf16.mxu0 0
        %712 = vmatpush1.bf16.msra.mxu0 0
        %713 = vmatprep.subr.bf16.mxu0 0
        %714 = vmatpush1.bf16.msra.mxu0 0
        %715 = vmatprep.subr.bf16.mxu0 0
        %716 = vmatpush1.bf16.msra.mxu0 0
        %717 = vmatprep.subr.bf16.mxu0 0
        %718 = vmatpush1.bf16.msra.mxu0 0
        %719 = vmatprep.mubr.bf16.mxu0 0
        %720 = vmatmul.mubr.bf16.gmra.mrb[0].mxu0 %v685
        %v721 = vpop.f32.mrb[0].mxu0
        %v722 = vadd.f32 0.0, %v721
        %v723 = vpop.f32.mrb[0].mxu0
        %v724 = vpop.f32.mrb[0].mxu0
        %v725 = vadd.f32 0.0, %v724
        %v726 = vpop.f32.mrb[0].mxu0
        %727 = vdwg.mxu0
        %v728 = vpack.c.bf16 %v725, %v722
        %v729 = vld [vmem:[%s7] sm:$0x1]
        %v731 = vlaneseq
        %v732 = vshrl.u32 %v731, 7
        %v733 = vsub.s32 0, %v732
        %v734 = vrot.slane %v729, %v733
        %736 = vmatprep.subr.bf16.mxu0 0
        %737 = vmatpush1.bf16.msra.mxu0 %v728
        %738 = vmatprep.subr.bf16.mxu0 0
        %739 = vmatpush1.bf16.msra.mxu0 0
        %740 = vmatprep.subr.bf16.mxu0 0
        %741 = vmatpush1.bf16.msra.mxu0 0
        %742 = vmatprep.subr.bf16.mxu0 0
        %743 = vmatpush1.bf16.msra.mxu0 0
        %744 = vmatprep.subr.bf16.mxu0 0
        %745 = vmatpush1.bf16.msra.mxu0 0
        %746 = vmatprep.subr.bf16.mxu0 0
        %747 = vmatpush1.bf16.msra.mxu0 0
        %748 = vmatprep.subr.bf16.mxu0 0
        %749 = vmatpush1.bf16.msra.mxu0 0
        %750 = vmatprep.subr.bf16.mxu0 0
        %751 = vmatpush1.bf16.msra.mxu0 0
        %752 = vmatprep.subr.bf16.mxu0 0
        %753 = vmatpush1.bf16.msra.mxu0 0
        %754 = vmatprep.subr.bf16.mxu0 0
        %755 = vmatpush1.bf16.msra.mxu0 0
        %756 = vmatprep.subr.bf16.mxu0 0
        %757 = vmatpush1.bf16.msra.mxu0 0
        %758 = vmatprep.subr.bf16.mxu0 0
        %759 = vmatpush1.bf16.msra.mxu0 0
        %760 = vmatprep.subr.bf16.mxu0 0
        %761 = vmatpush1.bf16.msra.mxu0 0
        %762 = vmatprep.subr.bf16.mxu0 0
        %763 = vmatpush1.bf16.msra.mxu0 0
        %764 = vmatprep.subr.bf16.mxu0 0
        %765 = vmatpush1.bf16.msra.mxu0 0
        %766 = vmatprep.subr.bf16.mxu0 0
        %767 = vmatpush1.bf16.msra.mxu0 0
        %768 = vmatprep.mubr.bf16.mxu0 0
        %769 = vmatmul.mubr.bf16.gmra.mrb[0].mxu0 %v492
        %v770 = vpop.f32.mrb[0].mxu0
        %v771 = vadd.f32 %v734, %v770
        %v772 = vpop.f32.mrb[0].mxu0
        %v773 = vpop.f32.mrb[0].mxu0
        %v774 = vadd.f32 %v734, %v773
        %v775 = vpop.f32.mrb[0].mxu0
        %776 = vdwg.mxu0
        %v777 = vmax.f32 %v771, 0.0
        %v778 = vmax.f32 %v774, 0.0
        %v779 = vpack.c.bf16 %v778, %v777
        %v780 = vld [vmem:[%s8] sm:$0xf]
        %v781 = vld [vmem:[%s8 + $0x4] sm:$0xf]
        %v784 = vunpack.c.l.b16 %v780
        %v785 = vunpack.c.l.b16 %v781
        %v786 = vpack.c.b16 %v785, %v784
        %v789 = vsel %vm433, %v779, 0
        %791 = vmatprep.subr.bf16.mxu0 0
        %792 = vmatpush1.bf16.msra.mxu0 %v786
        %793 = vmatprep.subr.bf16.mxu0 0
        %794 = vmatpush1.bf16.msra.mxu0 0
        %795 = vmatprep.subr.bf16.mxu0 0
        %796 = vmatpush1.bf16.msra.mxu0 0
        %797 = vmatprep.subr.bf16.mxu0 0
        %798 = vmatpush1.bf16.msra.mxu0 0
        %799 = vmatprep.subr.bf16.mxu0 0
        %800 = vmatpush1.bf16.msra.mxu0 0
        %801 = vmatprep.subr.bf16.mxu0 0
        %802 = vmatpush1.bf16.msra.mxu0 0
        %803 = vmatprep.subr.bf16.mxu0 0
        %804 = vmatpush1.bf16.msra.mxu0 0
        %805 = vmatprep.subr.bf16.mxu0 0
        %806 = vmatpush1.bf16.msra.mxu0 0
        %807 = vmatprep.subr.bf16.mxu0 0
        %808 = vmatpush1.bf16.msra.mxu0 0
        %809 = vmatprep.subr.bf16.mxu0 0
        %810 = vmatpush1.bf16.msra.mxu0 0
        %811 = vmatprep.subr.bf16.mxu0 0
        %812 = vmatpush1.bf16.msra.mxu0 0
        %813 = vmatprep.subr.bf16.mxu0 0
        %814 = vmatpush1.bf16.msra.mxu0 0
        %815 = vmatprep.subr.bf16.mxu0 0
        %816 = vmatpush1.bf16.msra.mxu0 0
        %817 = vmatprep.subr.bf16.mxu0 0
        %818 = vmatpush1.bf16.msra.mxu0 0
        %819 = vmatprep.subr.bf16.mxu0 0
        %820 = vmatpush1.bf16.msra.mxu0 0
        %821 = vmatprep.subr.bf16.mxu0 0
        %822 = vmatpush1.bf16.msra.mxu0 0
        %823 = vmatprep.mubr.bf16.mxu0 0
        %824 = vmatmul.mubr.bf16.gmra.mrb[0].mxu0 %v789
        %v825 = vpop.f32.mrb[0].mxu0
        %v826 = vadd.f32 0.0, %v825
        %v827 = vpop.f32.mrb[0].mxu0
        %v828 = vpop.f32.mrb[0].mxu0
        %v829 = vadd.f32 0.0, %v828
        %v830 = vpop.f32.mrb[0].mxu0
        %831 = vdwg.mxu0
        %v832 = vpack.c.bf16 %v829, %v826
        %v833 = vld [vmem:[%s9] sm:$0x1]
        %v835 = vlaneseq
        %v836 = vshrl.u32 %v835, 7
        %v837 = vsub.s32 0, %v836
        %v838 = vrot.slane %v833, %v837
        %840 = vmatprep.subr.bf16.mxu0 0
        %841 = vmatpush1.bf16.msra.mxu0 %v832
        %842 = vmatprep.subr.bf16.mxu0 0
        %843 = vmatpush1.bf16.msra.mxu0 0
        %844 = vmatprep.subr.bf16.mxu0 0
        %845 = vmatpush1.bf16.msra.mxu0 0
        %846 = vmatprep.subr.bf16.mxu0 0
        %847 = vmatpush1.bf16.msra.mxu0 0
        %848 = vmatprep.subr.bf16.mxu0 0
        %849 = vmatpush1.bf16.msra.mxu0 0
        %850 = vmatprep.subr.bf16.mxu0 0
        %851 = vmatpush1.bf16.msra.mxu0 0
        %852 = vmatprep.subr.bf16.mxu0 0
        %853 = vmatpush1.bf16.msra.mxu0 0
        %854 = vmatprep.subr.bf16.mxu0 0
        %855 = vmatpush1.bf16.msra.mxu0 0
        %856 = vmatprep.subr.bf16.mxu0 0
        %857 = vmatpush1.bf16.msra.mxu0 0
        %858 = vmatprep.subr.bf16.mxu0 0
        %859 = vmatpush1.bf16.msra.mxu0 0
        %860 = vmatprep.subr.bf16.mxu0 0
        %861 = vmatpush1.bf16.msra.mxu0 0
        %862 = vmatprep.subr.bf16.mxu0 0
        %863 = vmatpush1.bf16.msra.mxu0 0
        %864 = vmatprep.subr.bf16.mxu0 0
        %865 = vmatpush1.bf16.msra.mxu0 0
        %866 = vmatprep.subr.bf16.mxu0 0
        %867 = vmatpush1.bf16.msra.mxu0 0
        %868 = vmatprep.subr.bf16.mxu0 0
        %869 = vmatpush1.bf16.msra.mxu0 0
        %870 = vmatprep.subr.bf16.mxu0 0
        %871 = vmatpush1.bf16.msra.mxu0 0
        %872 = vmatprep.mubr.bf16.mxu0 0
        %873 = vmatmul.mubr.bf16.gmra.mrb[0].mxu0 %v492
        %v874 = vpop.f32.mrb[0].mxu0
        %v875 = vadd.f32 %v838, %v874
        %v876 = vpop.f32.mrb[0].mxu0
        %v877 = vpop.f32.mrb[0].mxu0
        %v878 = vadd.f32 %v838, %v877
        %v879 = vpop.f32.mrb[0].mxu0
        %880 = vdwg.mxu0
        %vm881 = vcmask 64512
        %882 = vst.msk [vmem:[%s414] sm:$0xff] %vm881, %v875
        %883 = vst.msk [vmem:[%s414 + $0x8] sm:$0xff] %vm881, %v878
        %p884 = scmp.lt.s32.totalorder %s25, 7
        %s885 = scalar_select %p884, %s25, 7
        %s886 = smul.addr %s885, 2
        %s887 = smul.addr %s886, 8
        %s888 = scalar_lea.vmem %s10, %s887
        // Predicated region
        $region69: #{tpu_custom_call.1} parent=59 // pred_check
          %p889 = pneg %p263
        $region70: #{tpu_custom_call.1} parent=59 // pred_check_branch
          %891 = sbr.rel (%p889) target = $region72
        $region71: #{tpu_custom_call.1} parent=59 // pred_region
          _
        $region72: #{tpu_custom_call.1} parent=59 // pred_fallthru
          _
      $region60: #{tpu_custom_call.1} parent=5 // pred_fallthru
        _
      %p892 = scmp.le.s32.totalorder 2, %s20
      // Predicated region
      $region73: #{tpu_custom_call.1} parent=5 // pred_check
        %p893 = pneg %p892
      $region74: #{tpu_custom_call.1} parent=5 // pred_check_branch
        %895 = sbr.rel (%p893) target = $region76
      $region75: #{tpu_custom_call.1} parent=5 // pred_region
        %s896 = ssub.s32 %s20, 2
        // Predicated region
        $region77: #{tpu_custom_call.1} parent=75 // pred_check
          %p897 = pneg %p269
        $region78: #{tpu_custom_call.1} parent=75 // pred_check_branch
          %899 = sbr.rel (%p897) target = $region80
        $region79: #{tpu_custom_call.1} parent=75 // pred_region
          %p900 = scmp.lt.s32.totalorder %s26, 7
          %s901 = scalar_select %p900, %s26, 7
          %s902 = smul.addr %s901, 2
          %s903 = smul.addr %s902, 8
          %s904 = scalar_lea.vmem %s10, %s903
        $region80: #{tpu_custom_call.1} parent=75 // pred_fallthru
          _
      $region76: #{tpu_custom_call.1} parent=5 // pred_fallthru
        _
    $region6: #{tpu_custom_call.1} parent=1 // loop_footer
      %s24 = sadd.s32 1, %s20
    $region7: #{tpu_custom_call.1} parent=1 // loop_footer_branch
      %19 = sbr.rel target = $region3
    $region8: #{tpu_custom_call.1} parent=1 // loop_exit
      _
    %905 = vsyncpa [#allocation3], 1
    %s906 = scalar_lea.sflag [#allocation3], 1
    %907 = vsyncpa %s906, 1
    %908 = vsyncpa [#allocation5], 1

</llo_original>
